<compile_context>
chip_gen: v5e
topology: v5e:2x2
jax: 0.10.0
libtpu: 0.0.40
codegen_flags: <defaults>
</compile_context>

<pallas_src>
import functools

import jax
import jax.numpy as jnp
from jax.experimental import pallas as pl
from jax.experimental.pallas import tpu as pltpu


def _ttp_head_kernel(x_ref, w_ref, b_ref, o_ref, *, pool, ho, wo, conv_first):
    """One batch tile per grid step.

    x_ref: (bn, H, Wp, C)   NHWC feature tile, W padded to a multiple of 8
    w_ref: (C, Kp)          1x1-conv weight, K padded to a multiple of 128
    b_ref: (1, Kp)          bias (padded)
    o_ref: (1, bn, Kp)      output logits slab (padded, lane-dense)
    """
    bn, h, wp, c = x_ref.shape
    kp = w_ref.shape[1]

    def pool_sum(t):
        # Unscaled separable stride-1 window sum over (H, W).  Only columns
        # 0 .. wo+pool-2 (= original W-1) are ever read, so the zero-padded
        # columns of Wp never contribute.
        acc_r = t[:, 0:ho, :, :]
        for di in range(1, pool):
            acc_r = acc_r + t[:, di:di + ho, :, :]
        acc = acc_r[:, :, 0:wo, :]
        for dj in range(1, pool):
            acc = acc + acc_r[:, :, dj:dj + wo, :]
        return acc  # (bn, ho, wo, ch)
        # TODO(synk): for large pool (>=5) a sliding-window/cumsum formulation
        # would cut VALU adds from O(pool) to O(1) per output element.

    if conv_first:
        # Kp < C: 1x1 conv first (one big MXU matmul, layout-free reshapes
        # because wp % 8 == 0 and kp % 128 == 0), then pool the Kp channels.
        x2d = x_ref[...].reshape(bn * h * wp, c)
        y2d = jnp.dot(x2d, w_ref[...], preferred_element_type=jnp.float32)
        y = y2d.reshape(bn, h, wp, kp)      # f32, bias NOT yet added
        acc = pool_sum(y)                   # (bn, ho, wo, kp)
    else:
        # Kp >= C: pool the (narrow) C channels first, then a small matmul
        # over only the valid output positions (the intermediates here are
        # small, so the unaligned reshapes are cheap).
        xs = pool_sum(x_ref[...].astype(jnp.float32))          # (bn, ho, wo, c)
        acc2d = jnp.dot(xs.reshape(bn * ho * wo, c),
                        w_ref[...].astype(jnp.float32),
                        preferred_element_type=jnp.float32)
        acc = acc2d.reshape(bn, ho, wo, kp)

    # adaptive_avgmax_pool2d(output=1): 0.5 * (avg + max).  All scalar factors
    # (1/pool^2, 1/(ho*wo), 0.5) and the bias are folded into this (bn, Kp)
    # epilogue; `acc` itself is never rescaled.
    z_sum = jnp.sum(acc, axis=(1, 2))       # (bn, kp)
    z_max = jnp.max(acc, axis=(1, 2))       # (bn, kp)
    bias = b_ref[0].astype(jnp.float32)
    scale = 0.5 / (pool * pool)
    out = scale * (z_sum * (1.0 / (ho * wo)) + z_max) + bias
    o_ref[0] = out.astype(o_ref.dtype)


def test_time_pool_head(x_nhwc, weight_ck, bias, *, original_pool):
    """x_nhwc: (N, H, W, C) features; weight_ck: (C, K); bias: (K,).

    Returns logits of shape (N, K) in the input dtype (accumulation is f32;
    note the PyTorch head would return f32 even for bf16 features).
    """
    n, h, w, c = x_nhwc.shape
    k = weight_ck.shape[1]
    pool = original_pool
    ho, wo = h - pool + 1, w - pool + 1
    assert ho >= 1 and wo >= 1, "original_pool larger than the feature map"

    # Lane-dense classes, sublane-aligned W.
    kp = pl.cdiv(k, 128) * 128
    wp = pl.cdiv(w, 8) * 8
    conv_first = kp < c   # pool Kp channels only if that is the narrower side

    w_pad = weight_ck if kp == k else (
        jnp.zeros((c, kp), weight_ck.dtype).at[:, :k].set(weight_ck))
    b_pad = jnp.zeros((1, kp), bias.dtype).at[0, :k].set(bias)

    # ---- generation-aware VMEM budgeting -------------------------------
    try:
        vmem_cap = int(pltpu.get_tpu_info().vmem_capacity_bytes)
    except Exception:
        vmem_cap = 64 * 1024 * 1024   # conservative (v7x-sized) fallback
    budget = vmem_cap // 2

    x_itemsize = jnp.dtype(x_nhwc.dtype).itemsize
    w_itemsize = jnp.dtype(weight_ck.dtype).itemsize

    def footprint(bn):
        inp = 2 * bn * h * wp * c * x_itemsize            # double-buffered input
        wgt = 2 * (c * kp + kp) * w_itemsize              # weight + bias buffers
        out = 2 * bn * kp * x_itemsize
        if conv_first:
            inter = 4 * bn * kp * (h * wp + ho * wp + ho * wo)
        else:
            inter = 4 * bn * (c * (h * wp + ho * wp + ho * wo) + 2 * ho * wo * kp)
        return inp + wgt + out + inter

    # ---- block_n selection (no divisor restriction) --------------------
    m_per = (h * wp) if conv_first else (ho * wo)
    bn = max(1, 512 // max(1, m_per))      # MXU M-dim target ~512 rows
    if n >= 8:
        bn = max(bn, 8)                    # sublane-aligned output slab
    if n >= 2:
        bn = min(bn, (n + 1) // 2)         # >= 2 grid steps -> both v7x cores
    else:
        bn = 1
    while bn > 1 and footprint(bn) > budget:
        bn = max(1, bn // 2)

    n_pad = pl.cdiv(n, bn) * bn
    num_steps = n_pad // bn

    pad_n, pad_w = n_pad - n, wp - w
    if pad_n or pad_w:
        # Padded batch rows produce garbage logits that are sliced off; padded
        # W columns never enter a valid pool window.
        x_in = jnp.pad(x_nhwc, ((0, pad_n), (0, 0), (0, pad_w), (0, 0)))
    else:
        x_in = x_nhwc

    vmem_limit = int(min(vmem_cap - (4 << 20),
                         max(2 * footprint(bn), 32 << 20)))

    kernel = functools.partial(_ttp_head_kernel, pool=pool, ho=ho, wo=wo,
                               conv_first=conv_first)

    out_slab = pl.pallas_call(
        kernel,
        out_shape=jax.ShapeDtypeStruct((num_steps, bn, kp), x_nhwc.dtype),
        grid_spec=pltpu.PrefetchScalarGridSpec(
            num_scalar_prefetch=0,
            grid=(num_steps,),
            in_specs=[
                pl.BlockSpec((bn, h, wp, c), lambda i: (i, 0, 0, 0)),
                # Constant block index -> weight/bias stay resident in VMEM.
                pl.BlockSpec((c, kp), lambda i: (0, 0)),
                pl.BlockSpec((1, kp), lambda i: (0, 0)),
            ],
            out_specs=pl.BlockSpec((1, bn, kp), lambda i: (i, 0, 0)),
        ),
        compiler_params=pltpu.CompilerParams(
            dimension_semantics=("parallel",),
            vmem_limit_bytes=vmem_limit,
        ),
    )(x_in, w_pad, b_pad)

    return out_slab.reshape(n_pad, kp)[:n, :k]


def ref_forward(x_nchw, weight_kc, bias, original_pool):
    """Pure-JAX reference mirroring the PyTorch module (NCHW, pool -> conv)."""
    n, c, h, w = x_nchw.shape
    ho, wo = h - original_pool + 1, w - original_pool + 1
    pooled = jnp.zeros((n, c, ho, wo), dtype=jnp.float32)
    for di in range(original_pool):
        for dj in range(original_pool):
            pooled = pooled + x_nchw[:, :, di:di + ho, dj:dj + wo]
    pooled = pooled / (original_pool * original_pool)
    z = jnp.einsum("nchw,kc->nkhw", pooled, weight_kc) + bias[None, :, None, None]
    z_avg = jnp.mean(z, axis=(2, 3))
    z_max = jnp.max(z, axis=(2, 3))
    return 0.5 * (z_avg + z_max)  # (N, K)


def _run_case(key, n, c, h, w, num_classes, pool):
    kx, kw, kb = jax.random.split(key, 3)
    x_nchw = jax.random.normal(kx, (n, c, h, w), dtype=jnp.float32)
    weight_kc = 0.1 * jax.random.normal(kw, (num_classes, c), dtype=jnp.float32)
    bias = 0.1 * jax.random.normal(kb, (num_classes,), dtype=jnp.float32)

    # Test glue only: the kernel contract is NHWC (the backbone should emit
    # NHWC directly / fuse the relayout); here we build NHWC test data from
    # the NCHW reference layout.
    x_nhwc = jnp.transpose(x_nchw, (0, 2, 3, 1))
    weight_ck = weight_kc.T

    out = test_time_pool_head(x_nhwc, weight_ck, bias, original_pool=pool)
    out = jax.block_until_ready(out)

    ref = ref_forward(x_nchw, weight_kc, bias, pool)
    assert out.shape == (n, num_classes), out.shape
    assert jnp.allclose(out, ref, rtol=1e-3, atol=1e-3), (
        f"mismatch: max abs err {jnp.max(jnp.abs(out - ref))}"
    )


if __name__ == "__main__":
    key = jax.random.PRNGKey(0)
    k1, k2 = jax.random.split(key)

    # Case 1: Kp >= C  -> pool-first path; W=7 exercises the W->8 padding.
    _run_case(k1, n=2, c=32, h=7, w=7, num_classes=16, pool=3)

    # Case 2: Kp < C   -> conv-first path; N=3 exercises batch padding
    #                     (block_n=2, grid=2, N padded to 4).
    _run_case(k2, n=3, c=256, h=8, w=8, num_classes=16, pool=3)

    print("KERNEL_OK")
</pallas_src>

<mosaic_0001>
module attributes {stable_mosaic.version = 11 : i64} {
  func.func @_ttp_head_kernel(%arg0: i32, %arg1: memref<1x7x8x32xf32, #tpu.memory_space<vmem>>, %arg2: memref<32x128xf32, #tpu.memory_space<vmem>>, %arg3: memref<1x128xf32, #tpu.memory_space<vmem>>, %arg4: memref<1x1x128xf32, #tpu.memory_space<vmem>>) attributes {dimension_semantics = [#tpu.dimension_semantics<parallel>], iteration_bounds = array<i64: 2>, scalar_prefetch = 0 : i64, scratch_operands = 0 : i64, tpu.core_type = #tpu.core_type<tc>, window_params = [{transform_indices = @transform_0, window_bounds = array<i64: 1, 7, 8, 32>}, {pipeline_mode = #tpu.pipeline_mode<synchronous>, transform_indices = @transform_1, window_bounds = array<i64: 32, 128>}, {pipeline_mode = #tpu.pipeline_mode<synchronous>, transform_indices = @transform_2, window_bounds = array<i64: 1, 128>}, {transform_indices = @transform_3, window_bounds = array<i64: 1, 1, 128>}]} {
    %c0 = arith.constant 0 : index
    %c0_0 = arith.constant 0 : index
    %c0_1 = arith.constant 0 : index
    %c0_2 = arith.constant 0 : index
    %0 = vector.load %arg1[%c0, %c0_0, %c0_1, %c0_2] : memref<1x7x8x32xf32, #tpu.memory_space<vmem>>, vector<1x7x8x32xf32>
    %1 = vector.extract_strided_slice %0 {offsets = [0, 0, 0, 0], sizes = [1, 5, 8, 32], strides = [1, 1, 1, 1]} : vector<1x7x8x32xf32> to vector<1x5x8x32xf32>
    %2 = vector.extract_strided_slice %0 {offsets = [0, 1, 0, 0], sizes = [1, 5, 8, 32], strides = [1, 1, 1, 1]} : vector<1x7x8x32xf32> to vector<1x5x8x32xf32>
    %3 = arith.addf %1, %2 : vector<1x5x8x32xf32>
    %4 = vector.extract_strided_slice %0 {offsets = [0, 2, 0, 0], sizes = [1, 5, 8, 32], strides = [1, 1, 1, 1]} : vector<1x7x8x32xf32> to vector<1x5x8x32xf32>
    %5 = arith.addf %3, %4 : vector<1x5x8x32xf32>
    %6 = vector.extract_strided_slice %5 {offsets = [0, 0, 0, 0], sizes = [1, 5, 5, 32], strides = [1, 1, 1, 1]} : vector<1x5x8x32xf32> to vector<1x5x5x32xf32>
    %7 = vector.extract_strided_slice %5 {offsets = [0, 0, 1, 0], sizes = [1, 5, 5, 32], strides = [1, 1, 1, 1]} : vector<1x5x8x32xf32> to vector<1x5x5x32xf32>
    %8 = arith.addf %6, %7 : vector<1x5x5x32xf32>
    %9 = vector.extract_strided_slice %5 {offsets = [0, 0, 2, 0], sizes = [1, 5, 5, 32], strides = [1, 1, 1, 1]} : vector<1x5x8x32xf32> to vector<1x5x5x32xf32>
    %10 = arith.addf %8, %9 : vector<1x5x5x32xf32>
    %11 = vector.shape_cast %10 : vector<1x5x5x32xf32> to vector<25x32xf32>
    %c0_3 = arith.constant 0 : index
    %c0_4 = arith.constant 0 : index
    %12 = vector.load %arg2[%c0_3, %c0_4] : memref<32x128xf32, #tpu.memory_space<vmem>>, vector<32x128xf32>
    %cst = arith.constant dense<0.000000e+00> : vector<25x128xf32>
    %13 = tpu.matmul %11, %12, %cst {dimension_numbers = #tpu.dot_dimension_numbers<[1], [0], [0], [1], [0, 0, 1, 1], [], []>} : vector<25x32xf32>, vector<32x128xf32>, vector<25x128xf32> -> vector<25x128xf32>
    %14 = vector.shape_cast %13 : vector<25x128xf32> to vector<1x5x5x128xf32>
    %cst_5 = arith.constant dense<0.000000e+00> : vector<1x128xf32>
    %15 = vector.multi_reduction <add>, %14, %cst_5 [1, 2] : vector<1x5x5x128xf32> to vector<1x128xf32>
    %cst_6 = arith.constant dense<0xFF800000> : vector<1x128xf32>
    %16 = vector.multi_reduction <maximumf>, %14, %cst_6 [1, 2] : vector<1x5x5x128xf32> to vector<1x128xf32>
    %c0_7 = arith.constant 0 : index
    %c0_8 = arith.constant 0 : index
    %17 = vector.load %arg3[%c0_7, %c0_8] : memref<1x128xf32, #tpu.memory_space<vmem>>, vector<1x128xf32>
    %18 = vector.shape_cast %17 : vector<1x128xf32> to vector<128xf32>
    %cst_9 = arith.constant 4.000000e-02 : f32
    %19 = vector.broadcast %cst_9 : f32 to vector<1x128xf32>
    %20 = arith.mulf %15, %19 : vector<1x128xf32>
    %21 = arith.addf %20, %16 : vector<1x128xf32>
    %cst_10 = arith.constant 0.055555556 : f32
    %22 = vector.broadcast %cst_10 : f32 to vector<1x128xf32>
    %23 = arith.mulf %22, %21 : vector<1x128xf32>
    %24 = vector.shape_cast %18 : vector<128xf32> to vector<1x128xf32>
    %25 = arith.addf %23, %24 : vector<1x128xf32>
    %c0_11 = arith.constant 0 : index
    %c0_12 = arith.constant 0 : index
    %c0_13 = arith.constant 0 : index
    %26 = vector.load %arg4[%c0_11, %c0_12, %c0_13] : memref<1x1x128xf32, #tpu.memory_space<vmem>>, vector<1x1x128xf32>
    %27 = vector.shape_cast %26 : vector<1x1x128xf32> to vector<1x128xf32>
    %28 = vector.shape_cast %25 : vector<1x128xf32> to vector<1x1x128xf32>
    tpu.vector_store %arg4[%c0_11, %c0_12, %c0_13], %28 {strides = array<i32>} : memref<1x1x128xf32, #tpu.memory_space<vmem>>, vector<1x1x128xf32>,
    return
  }
  func.func @transform_0(%arg0: i32) -> (i32, i32, i32, i32) {
    %c0_i32 = arith.constant 0 : i32
    %c0_i32_0 = arith.constant 0 : i32
    %c0_i32_1 = arith.constant 0 : i32
    %c0_i32_2 = arith.constant 0 : i32
    return %arg0, %c0_i32, %c0_i32_0, %c0_i32_1 : i32, i32, i32, i32
  }
  func.func @transform_1(%arg0: i32) -> (i32, i32) {
    %c0_i32 = arith.constant 0 : i32
    %c0_i32_0 = arith.constant 0 : i32
    %c0_i32_1 = arith.constant 0 : i32
    return %c0_i32, %c0_i32_0 : i32, i32
  }
  func.func @transform_2(%arg0: i32) -> (i32, i32) {
    %c0_i32 = arith.constant 0 : i32
    %c0_i32_0 = arith.constant 0 : i32
    %c0_i32_1 = arith.constant 0 : i32
    return %c0_i32, %c0_i32_0 : i32, i32
  }
  func.func @transform_3(%arg0: i32) -> (i32, i32, i32) {
    %c0_i32 = arith.constant 0 : i32
    %c0_i32_0 = arith.constant 0 : i32
    %c0_i32_1 = arith.constant 0 : i32
    return %arg0, %c0_i32, %c0_i32_0 : i32, i32, i32
  }
}

</mosaic_0001>

<llo_original>
// kernel: tpu_custom_call.1
$region0: #{tpu_custom_call.1}
  #allocation0 [shape = 'u32[]', space=smem, size = 0x4, offset = 0x4, fixed_abs, tag = 'smem constant byte address 0x4 - core index']
  #allocation1 [shape = 'u32[72,128]{1,0:T(1,128)}', space=vmem, size = 0x9000, scoped, tag = 'internal scratch']
  %s0 = inlined_call_operand.hbm [shape: f32[2,7,8,32], index: 0, kind: input, shape index: {}]
  %s1 = inlined_call_operand.hbm [shape: f32[32,128], index: 1, kind: input, shape index: {}]
  %s2 = inlined_call_operand.vmem [shape: f32[1,128], index: 2, kind: input, shape index: {}]
  %s3 = inlined_call_operand.hbm [shape: f32[2,1,128], index: 3, kind: output, shape index: {}]
  %s4 = sld [smem:[#allocation0]]
  $region53: #{tpu_custom_call.1} parent=0
    _
  %s6 = ssub.s32 1, %s4
  %s7 = scalar_select 0, %s6, %s4
  $region1: #{tpu_custom_call.1} parent=0
    #allocation2 [shape = 'u8[57344]{0}', space=vmem, size = 0xe000, scoped, tag = 'input window, operand 0']
    #allocation3 [shape = 's32[2]{0}', space=sflag, size = 0x8, scoped, tag = 'scoped memory for tpu_custom_call.1']
    #allocation4 [shape = 's32[2]{0}', space=sflag, size = 0x8, scoped, tag = 'scoped memory for tpu_custom_call.1']
    #allocation5 [shape = 'u8[16384]{0}', space=vmem, size = 0x4000, scoped, tag = 'input window, operand 1, single buffered']
    #allocation6 [shape = 's32[1]{0}', space=sflag, size = 0x4, scoped, tag = 'scoped memory for tpu_custom_call.1']
    #allocation7 [shape = 'u8[1024]{0}', space=vmem, size = 0x400, scoped, tag = 'output window, operand 0']
    %8 = vsyncpa [#allocation3], 0
    %s9 = scalar_lea.sflag [#allocation3], 1
    %10 = vsyncpa %s9, 0
    %11 = vsyncpa [#allocation6], 0
    %12 = vsyncpa [#allocation4], 0
    %s13 = scalar_lea.sflag [#allocation4], 1
    %14 = vsyncpa %s13, 0
    loop: start=0, step=1, limit=4
    $region2: #{tpu_custom_call.1} parent=1 // loop_pre_header
      _
    $region3: #{tpu_custom_call.1} parent=1 // loop_header
      %s16 = sphi 0, %s20
      %p17 = scmp.ge.s32.totalorder %s16, 4
      %s26 = sphi 0, %s28
      %s29 = sphi 0, %s26
      %s30 = sphi 0, %s29
      %s46 = sphi 0, %s30
      %s50 = sphi 0, %s50
      %s52 = sphi 0, %s50
      %s53 = sphi 0, %s52
      %s67 = sphi 0, %s53
      %s71 = sphi 0, %s71
      %s73 = sphi 0, %s71
      %s74 = sphi 0, %s73
      %s88 = sphi 0, %s74
      %s94 = sphi 0, %s96
      %s97 = sphi 0, %s94
      %s98 = sphi 0, %s97
      %s114 = sphi 0, %s98
    $region4: #{tpu_custom_call.1} parent=1 // loop_header_branch
      %19 = sbr.rel (%p17) target = $region8
    $region5: #{tpu_custom_call.1} parent=1 // loop_body
      %s21 = ssub.s32 %s16, 1
      %s22 = ssub.s32 %s16, 2
      %s23 = sadd.s32 %s16, 1
      %s24 = ssub.s32 %s16, %s23
      %p25 = scmp.eq.s32.totalorder %s24, 0
      %s27 = sadd.s32 %s26, 1
      %s28 = scalar_select %p25, %s26, %s27
      %p31 = pneg %p25
      %p32 = scmp.eq.s32.totalorder %s16, 1
      %p33 = por %p31, %p32
      %p34 = scmp.ne.s32.totalorder %s26, %s29
      %p35 = scmp.eq.s32.totalorder %s16, 0
      %p36 = por %p34, %p35
      %p37 = scmp.ne.s32.totalorder %s26, %s29
      %p38 = scmp.eq.s32.totalorder %s21, 1
      %p39 = por %p37, %p38
      %p40 = scmp.ne.s32.totalorder %s29, %s30
      %p41 = scmp.eq.s32.totalorder %s21, 0
      %p42 = por %p40, %p41
      %p43 = scmp.ne.s32.totalorder %s29, %s30
      %p44 = scmp.eq.s32.totalorder %s22, 1
      %p45 = por %p43, %p44
      %p47 = scmp.ne.s32.totalorder %s30, %s46
      %p48 = scmp.eq.s32.totalorder %s22, 0
      %p49 = por %p47, %p48
      %s51 = sadd.s32 %s50, 1
      %p54 = scmp.eq.s32.totalorder %s16, 1
      %p55 = scmp.ne.s32.totalorder %s50, %s52
      %p56 = scmp.eq.s32.totalorder %s16, 0
      %p57 = por %p55, %p56
      %p58 = scmp.ne.s32.totalorder %s50, %s52
      %p59 = scmp.eq.s32.totalorder %s21, 1
      %p60 = por %p58, %p59
      %p61 = scmp.ne.s32.totalorder %s52, %s53
      %p62 = scmp.eq.s32.totalorder %s21, 0
      %p63 = por %p61, %p62
      %p64 = scmp.ne.s32.totalorder %s52, %s53
      %p65 = scmp.eq.s32.totalorder %s22, 1
      %p66 = por %p64, %p65
      %p68 = scmp.ne.s32.totalorder %s53, %s67
      %p69 = scmp.eq.s32.totalorder %s22, 0
      %p70 = por %p68, %p69
      %s72 = sadd.s32 %s71, 1
      %p75 = scmp.eq.s32.totalorder %s16, 1
      %p76 = scmp.ne.s32.totalorder %s71, %s73
      %p77 = scmp.eq.s32.totalorder %s16, 0
      %p78 = por %p76, %p77
      %p79 = scmp.ne.s32.totalorder %s71, %s73
      %p80 = scmp.eq.s32.totalorder %s21, 1
      %p81 = por %p79, %p80
      %p82 = scmp.ne.s32.totalorder %s73, %s74
      %p83 = scmp.eq.s32.totalorder %s21, 0
      %p84 = por %p82, %p83
      %p85 = scmp.ne.s32.totalorder %s73, %s74
      %p86 = scmp.eq.s32.totalorder %s22, 1
      %p87 = por %p85, %p86
      %p89 = scmp.ne.s32.totalorder %s74, %s88
      %p90 = scmp.eq.s32.totalorder %s22, 0
      %p91 = por %p89, %p90
      %s92 = ssub.s32 %s16, %s23
      %p93 = scmp.eq.s32.totalorder %s92, 0
      %s95 = sadd.s32 %s94, 1
      %s96 = scalar_select %p93, %s94, %s95
      %p99 = pneg %p93
      %p100 = scmp.eq.s32.totalorder %s16, 1
      %p101 = por %p99, %p100
      %p102 = scmp.ne.s32.totalorder %s94, %s97
      %p103 = scmp.eq.s32.totalorder %s16, 0
      %p104 = por %p102, %p103
      %p105 = scmp.ne.s32.totalorder %s94, %s97
      %p106 = scmp.eq.s32.totalorder %s21, 1
      %p107 = por %p105, %p106
      %p108 = scmp.ne.s32.totalorder %s97, %s98
      %p109 = scmp.eq.s32.totalorder %s21, 0
      %p110 = por %p108, %p109
      %p111 = scmp.ne.s32.totalorder %s97, %s98
      %p112 = scmp.eq.s32.totalorder %s22, 1
      %p113 = por %p111, %p112
      %p115 = scmp.ne.s32.totalorder %s98, %s114
      %p116 = scmp.eq.s32.totalorder %s22, 0
      %p117 = por %p115, %p116
      %p118 = scmp.le.s32.totalorder 1, %s16
      %p119 = scmp.lt.s32.totalorder %s16, 3
      %p120 = pnand %p118, %p119
      %p121 = pneg %p120
      // Predicated region
      $region9: #{tpu_custom_call.1} parent=5 // pred_check
        _
      $region10: #{tpu_custom_call.1} parent=5 // pred_check_branch
        %123 = sbr.rel (%p120) target = $region12
      $region11: #{tpu_custom_call.1} parent=5 // pred_region
        %s124 = ssub.s32 %s16, 1
        // Predicated region
        $region13: #{tpu_custom_call.1} parent=11 // pred_check
          %p125 = pneg %p63
        $region14: #{tpu_custom_call.1} parent=11 // pred_check_branch
          %127 = sbr.rel (%p125) target = $region16
        $region15: #{tpu_custom_call.1} parent=11 // pred_region
          %129 = vsyncadd [#allocation6], 0
          %s130 = sshll.u32 %s1, 4
          %s131 = int_to_ptr.hbm [resolvable:$true] %s130
          %s132 = sshll.u32 [#allocation5], 4
          %s133 = int_to_ptr.vmem [resolvable:$true] %s132
          %138 = dma.hbm_to_vmem [thread:$0]  %s131, 512, %s133, [#allocation6], 128, 128, 8
        $region16: #{tpu_custom_call.1} parent=11 // pred_fallthru
          _
        // Predicated region
        $region17: #{tpu_custom_call.1} parent=11 // pred_check
          %p139 = pneg %p84
        $region18: #{tpu_custom_call.1} parent=11 // pred_check_branch
          %141 = sbr.rel (%p139) target = $region20
        $region19: #{tpu_custom_call.1} parent=11 // pred_region
          _
        $region20: #{tpu_custom_call.1} parent=11 // pred_fallthru
          _
      $region12: #{tpu_custom_call.1} parent=5 // pred_fallthru
        _
      %p142 = scmp.lt.s32.totalorder %s16, 2
      // Predicated region
      $region21: #{tpu_custom_call.1} parent=5 // pred_check
        %p143 = pneg %p142
      $region22: #{tpu_custom_call.1} parent=5 // pred_check_branch
        %145 = sbr.rel (%p143) target = $region24
      $region23: #{tpu_custom_call.1} parent=5 // pred_region
        // Predicated region
        $region25: #{tpu_custom_call.1} parent=23 // pred_check
          %p146 = pneg %p36
        $region26: #{tpu_custom_call.1} parent=23 // pred_check_branch
          %148 = sbr.rel (%p146) target = $region28
        $region27: #{tpu_custom_call.1} parent=23 // pred_region
          %s149 = sand.u32 %s26, 1
          %s150 = scalar_lea.sflag [#allocation3], %s149
          %s151 = sand.u32 %s26, 1
          %s152 = smul.addr %s151, 56
          %s153 = scalar_lea.vmem [#allocation2], %s152
          %155 = vsyncadd %s150, 0
          %s156 = smul.addr %s16, 7
          %s157 = smul.addr %s156, 8
          %s158 = scalar_lea.hbm %s0, %s157
          %s159 = sshll.u32 %s158, 4
          %s160 = int_to_ptr.hbm [resolvable:$true] %s159
          %s161 = sshll.u32 %s153, 4
          %s162 = int_to_ptr.vmem [resolvable:$true] %s161
          %167 = dma.hbm_to_vmem [thread:$0]  %s160, 896, %s162, %s150, 128, 128, 8
        $region28: #{tpu_custom_call.1} parent=23 // pred_fallthru
          _
      $region24: #{tpu_custom_call.1} parent=5 // pred_fallthru
        _
      %p168 = scmp.le.s32.totalorder 1, %s16
      %p169 = scmp.lt.s32.totalorder %s16, 3
      %p170 = pnand %p168, %p169
      %p171 = pneg %p170
      // Predicated region
      $region29: #{tpu_custom_call.1} parent=5 // pred_check
        _
      $region30: #{tpu_custom_call.1} parent=5 // pred_check_branch
        %173 = sbr.rel (%p170) target = $region32
      $region31: #{tpu_custom_call.1} parent=5 // pred_region
        %s174 = ssub.s32 %s16, 1
        %s175 = sand.u32 %s29, 1
        %s176 = scalar_lea.sflag [#allocation3], %s175
        %s177 = sand.u32 %s29, 1
        %s178 = smul.addr %s177, 56
        %s179 = scalar_lea.vmem [#allocation2], %s178
        // Predicated region
        $region33: #{tpu_custom_call.1} parent=31 // pred_check
          %p180 = pneg %p42
        $region34: #{tpu_custom_call.1} parent=31 // pred_check_branch
          %182 = sbr.rel (%p180) target = $region36
        $region35: #{tpu_custom_call.1} parent=31 // pred_region
          %184 = dma.done %s176, 896
        $region36: #{tpu_custom_call.1} parent=31 // pred_fallthru
          _
        // Predicated region
        $region37: #{tpu_custom_call.1} parent=31 // pred_check
          %p185 = pneg %p63
        $region38: #{tpu_custom_call.1} parent=31 // pred_check_branch
          %187 = sbr.rel (%p185) target = $region40
        $region39: #{tpu_custom_call.1} parent=31 // pred_region
          %189 = dma.done [#allocation6], 512
        $region40: #{tpu_custom_call.1} parent=31 // pred_fallthru
          _
        %s190 = sand.u32 %s29, 1
        %s191 = scalar_lea.sflag [#allocation3], %s190
        %s192 = sand.u32 %s29, 1
        %s193 = smul.addr %s192, 56
        %s194 = scalar_lea.vmem [#allocation2], %s193
        %p195 = pneg %p42
        %p196 = pneg %p39
        %p197 = pneg %p63
        %p198 = pneg %p60
        %p199 = pneg %p84
        %p200 = pneg %p81
        %p201 = pneg %p110
        %p202 = pneg %p107
        %s203 = sand.u32 %s97, 1
        %s204 = scalar_lea.sflag [#allocation4], %s203
        %s205 = sand.u32 %s97, 1
        %s206 = scalar_lea.vmem [#allocation7], %s205
        %v207 = vld [vmem:[%s179] sm:$0xff]
        %v208 = vld [vmem:[%s179 + $0x8] sm:$0xff]
        %v209 = vld [vmem:[%s179 + $0x10] sm:$0xff]
        %v210 = vld [vmem:[%s179 + $0x18] sm:$0xff]
        %v211 = vld [vmem:[%s179 + $0x20] sm:$0xff]
        %v212 = vld [vmem:[%s179 + $0x28] sm:$0xff]
        %v213 = vld [vmem:[%s179 + $0x30] sm:$0xff]
        %v214 = vadd.f32 %v207, %v208
        %v215 = vadd.f32 %v208, %v209
        %v216 = vadd.f32 %v209, %v210
        %v217 = vadd.f32 %v210, %v211
        %v218 = vadd.f32 %v211, %v212
        %v219 = vadd.f32 %v214, %v209
        %v220 = vadd.f32 %v215, %v210
        %v221 = vadd.f32 %v216, %v211
        %v222 = vadd.f32 %v217, %v212
        %v223 = vadd.f32 %v218, %v213
        %v229 = vrot.slane %v219, 1
        %v230 = vrot.slane %v220, 1
        %v231 = vrot.slane %v221, 1
        %v232 = vrot.slane %v222, 1
        %v233 = vrot.slane %v223, 1
        %v239 = vadd.f32 %v219, %v229
        %v240 = vadd.f32 %v220, %v230
        %v241 = vadd.f32 %v221, %v231
        %v242 = vadd.f32 %v222, %v232
        %v243 = vadd.f32 %v223, %v233
        %v244 = vrot.slane %v219, 2
        %v245 = vrot.slane %v220, 2
        %v246 = vrot.slane %v221, 2
        %v247 = vrot.slane %v222, 2
        %v248 = vrot.slane %v223, 2
        %v254 = vadd.f32 %v239, %v244
        %v255 = vadd.f32 %v240, %v245
        %v256 = vadd.f32 %v241, %v246
        %v257 = vadd.f32 %v242, %v247
        %v258 = vadd.f32 %v243, %v248
        %v264 = vrot.slane %v254, 1
        %v265 = vrot.slane %v254, 2
        %v266 = vrot.slane %v254, 3
        %v267 = vrot.slane %v254, 4
        %v268 = vrot.slane %v255, 1
        %v269 = vrot.slane %v255, 2
        %v270 = vrot.slane %v255, 3
        %v271 = vrot.slane %v255, 4
        %v272 = vrot.slane %v256, 1
        %v273 = vrot.slane %v256, 2
        %v274 = vrot.slane %v256, 3
        %v275 = vrot.slane %v256, 4
        %v276 = vrot.slane %v257, 1
        %v277 = vrot.slane %v257, 2
        %v278 = vrot.slane %v257, 3
        %v279 = vrot.slane %v257, 4
        %v280 = vrot.slane %v258, 1
        %v281 = vrot.slane %v258, 2
        %v282 = vrot.slane %v258, 3
        %v283 = vrot.slane %v258, 4
        %v284 = vld [vmem:[#allocation5] sm:$0xff]
        %v285 = vld [vmem:[#allocation5 + $0x8] sm:$0xff]
        %v286 = vld [vmem:[#allocation5 + $0x10] sm:$0xff]
        %v287 = vld [vmem:[#allocation5 + $0x18] sm:$0xff]
        %288 = vst [vmem:[#allocation1] ss:$9 sm:$0xff] %v254
        %s289 = scalar_lea.vmem [#allocation1], 1
        %290 = vst [vmem:[%s289] ss:$9 sm:$0xff] %v264
        %s291 = scalar_lea.vmem [#allocation1], 2
        %292 = vst [vmem:[%s291] ss:$9 sm:$0xff] %v265
        %s293 = scalar_lea.vmem [#allocation1], 3
        %294 = vst [vmem:[%s293] ss:$9 sm:$0xff] %v266
        %s295 = scalar_lea.vmem [#allocation1], 4
        %296 = vst [vmem:[%s295] ss:$9 sm:$0xff] %v267
        %s297 = scalar_lea.vmem [#allocation1], 5
        %298 = vst [vmem:[%s297] ss:$9 sm:$0xff] %v255
        %s299 = scalar_lea.vmem [#allocation1], 6
        %300 = vst [vmem:[%s299] ss:$9 sm:$0xff] %v268
        %s301 = scalar_lea.vmem [#allocation1], 7
        %302 = vst [vmem:[%s301] ss:$9 sm:$0xff] %v269
        %v303 = vld [vmem:[#allocation1] sm:$0xff]
        %304 = vst [vmem:[#allocation1] ss:$9 sm:$0xff] %v270
        %305 = vst [vmem:[%s289] ss:$9 sm:$0xff] %v271
        %306 = vst [vmem:[%s291] ss:$9 sm:$0xff] %v256
        %307 = vst [vmem:[%s293] ss:$9 sm:$0xff] %v272
        %308 = vst [vmem:[%s295] ss:$9 sm:$0xff] %v273
        %309 = vst [vmem:[%s297] ss:$9 sm:$0xff] %v274
        %310 = vst [vmem:[%s299] ss:$9 sm:$0xff] %v275
        %311 = vst [vmem:[%s301] ss:$9 sm:$0xff] %v257
        %v312 = vld [vmem:[#allocation1] sm:$0xff]
        %313 = vst [vmem:[#allocation1] ss:$9 sm:$0xff] %v276
        %314 = vst [vmem:[%s289] ss:$9 sm:$0xff] %v277
        %315 = vst [vmem:[%s291] ss:$9 sm:$0xff] %v278
        %316 = vst [vmem:[%s293] ss:$9 sm:$0xff] %v279
        %317 = vst [vmem:[%s295] ss:$9 sm:$0xff] %v258
        %318 = vst [vmem:[%s297] ss:$9 sm:$0xff] %v280
        %319 = vst [vmem:[%s299] ss:$9 sm:$0xff] %v281
        %320 = vst [vmem:[%s301] ss:$9 sm:$0xff] %v282
        %v321 = vld [vmem:[#allocation1] sm:$0xff]
        %322 = vst [vmem:[#allocation1] ss:$9 sm:$0xff] %v283
        %v323 = vld [vmem:[#allocation1] sm:$0xff]
        %vm324 = vcmask 261120
        %v325 = vsel %vm324, %v303, 0
        %v327 = vsel %vm324, %v312, 0
        %v329 = vsel %vm324, %v321, 0
        %v331 = vsel %vm324, %v323, 0
        %333 = vmatpush.msra.mxu0 0.0
        %334 = vmatpush.msra.mxu0 0.0
        %335 = vmatpush.msra.mxu0 0.0
        %336 = vmatpush.msra.mxu0 0.0
        %337 = vmatpush.msra.mxu0 0.0
        %338 = vmatpush.msra.mxu0 0.0
        %339 = vmatpush.msra.mxu0 0.0
        %340 = vmatpush.msra.mxu0 0.0
        %341 = vmatpush.msra.mxu0 0.0
        %342 = vmatpush.msra.mxu0 0.0
        %343 = vmatpush.msra.mxu0 0.0
        %344 = vmatpush.msra.mxu0 0.0
        %345 = vmatpush.msra.mxu0 %v287
        %346 = vmatpush.msra.mxu0 %v286
        %347 = vmatpush.msra.mxu0 %v285
        %348 = vmatpush.msra.mxu0 %v284
        %349 = vmatmul.f32.gmra.mxu0 %v325
        %v350 = vpop.f32.mrf.mxu0
        %v351 = vadd.f32 0.0, %v350
        %352 = vmatmul.f32.gmra.mxu0 %v327
        %v353 = vpop.f32.mrf.mxu0
        %v354 = vadd.f32 0.0, %v353
        %355 = vmatmul.f32.gmra.mxu0 %v329
        %v356 = vpop.f32.mrf.mxu0
        %v357 = vadd.f32 0.0, %v356
        %358 = vmatmul.f32.gmra.mxu0 %v331
        %v359 = vpop.f32.mrf.mxu0
        %v360 = vadd.f32 0.0, %v359
        %361 = vdwg.mxu0
        %v366 = vrot.slane %v351, 1
        %v367 = vrot.slane %v351, 2
        %v368 = vrot.slane %v351, 3
        %v369 = vrot.slane %v351, 4
        %v370 = vrot.slane %v351, 5
        %v371 = vrot.slane %v351, 6
        %v372 = vrot.slane %v351, 7
        %v373 = vrot.slane %v354, 1
        %v374 = vrot.slane %v354, 2
        %v375 = vrot.slane %v354, 3
        %v376 = vrot.slane %v354, 4
        %v377 = vrot.slane %v354, 5
        %v378 = vrot.slane %v354, 6
        %v379 = vrot.slane %v354, 7
        %v380 = vrot.slane %v357, 1
        %v381 = vrot.slane %v357, 2
        %v382 = vrot.slane %v357, 3
        %v383 = vrot.slane %v357, 4
        %v384 = vrot.slane %v357, 5
        %v385 = vrot.slane %v357, 6
        %v386 = vrot.slane %v357, 7
        %387 = vst [vmem:[#allocation1] ss:$9 sm:$0xff] %v351
        %s388 = scalar_lea.vmem [#allocation1], 1
        %389 = vst [vmem:[%s388] ss:$9 sm:$0xff] %v366
        %s390 = scalar_lea.vmem [#allocation1], 2
        %391 = vst [vmem:[%s390] ss:$9 sm:$0xff] %v367
        %s392 = scalar_lea.vmem [#allocation1], 3
        %393 = vst [vmem:[%s392] ss:$9 sm:$0xff] %v368
        %s394 = scalar_lea.vmem [#allocation1], 4
        %395 = vst [vmem:[%s394] ss:$9 sm:$0xff] %v369
        %v396 = vld [vmem:[#allocation1] sm:$0xff]
        %397 = vst [vmem:[#allocation1] ss:$9 sm:$0xff] %v370
        %398 = vst [vmem:[%s388] ss:$9 sm:$0xff] %v371
        %399 = vst [vmem:[%s390] ss:$9 sm:$0xff] %v372
        %400 = vst [vmem:[%s392] ss:$9 sm:$0xff] %v354
        %401 = vst [vmem:[%s394] ss:$9 sm:$0xff] %v373
        %v402 = vld [vmem:[#allocation1] sm:$0xff]
        %403 = vst [vmem:[#allocation1] ss:$9 sm:$0xff] %v374
        %404 = vst [vmem:[%s388] ss:$9 sm:$0xff] %v375
        %405 = vst [vmem:[%s390] ss:$9 sm:$0xff] %v376
        %406 = vst [vmem:[%s392] ss:$9 sm:$0xff] %v377
        %407 = vst [vmem:[%s394] ss:$9 sm:$0xff] %v378
        %v408 = vld [vmem:[#allocation1] sm:$0xff]
        %409 = vst [vmem:[#allocation1] ss:$9 sm:$0xff] %v379
        %410 = vst [vmem:[%s388] ss:$9 sm:$0xff] %v357
        %411 = vst [vmem:[%s390] ss:$9 sm:$0xff] %v380
        %412 = vst [vmem:[%s392] ss:$9 sm:$0xff] %v381
        %413 = vst [vmem:[%s394] ss:$9 sm:$0xff] %v382
        %v414 = vld [vmem:[#allocation1] sm:$0xff]
        %415 = vst [vmem:[#allocation1] ss:$9 sm:$0xff] %v383
        %416 = vst [vmem:[%s388] ss:$9 sm:$0xff] %v384
        %417 = vst [vmem:[%s390] ss:$9 sm:$0xff] %v385
        %418 = vst [vmem:[%s392] ss:$9 sm:$0xff] %v386
        %419 = vst [vmem:[%s394] ss:$9 sm:$0xff] %v360
        %v420 = vld [vmem:[#allocation1] sm:$0xff]
        %vm426 = vcmask 1044480
        %v427 = vsel %vm426, %v396, 0.0
        %v428 = vsel %vm426, %v402, 0.0
        %v429 = vadd.f32 %v427, %v428
        %v430 = vsel %vm426, %v408, 0.0
        %v431 = vadd.f32 %v429, %v430
        %v432 = vsel %vm426, %v414, 0.0
        %v433 = vadd.f32 %v431, %v432
        %v434 = vsel %vm426, %v420, 0.0
        %v435 = vadd.f32 %v433, %v434
        %v436 = vrot.slane %v435, 4
        %v437 = vadd.f32 %v435, %v436
        %v438 = vrot.slane %v437, 2
        %v439 = vadd.f32 %v437, %v438
        %v440 = vrot.slane %v439, 1
        %v441 = vadd.f32 %v439, %v440
        %442 = vst [vmem:[#allocation1] ss:$9 sm:$0xff] %v351
        %s443 = scalar_lea.vmem [#allocation1], 1
        %444 = vst [vmem:[%s443] ss:$9 sm:$0xff] %v366
        %s445 = scalar_lea.vmem [#allocation1], 2
        %446 = vst [vmem:[%s445] ss:$9 sm:$0xff] %v367
        %s447 = scalar_lea.vmem [#allocation1], 3
        %448 = vst [vmem:[%s447] ss:$9 sm:$0xff] %v368
        %s449 = scalar_lea.vmem [#allocation1], 4
        %450 = vst [vmem:[%s449] ss:$9 sm:$0xff] %v369
        %v451 = vld [vmem:[#allocation1] sm:$0xff]
        %452 = vst [vmem:[#allocation1] ss:$9 sm:$0xff] %v370
        %453 = vst [vmem:[%s443] ss:$9 sm:$0xff] %v371
        %454 = vst [vmem:[%s445] ss:$9 sm:$0xff] %v372
        %455 = vst [vmem:[%s447] ss:$9 sm:$0xff] %v354
        %456 = vst [vmem:[%s449] ss:$9 sm:$0xff] %v373
        %v457 = vld [vmem:[#allocation1] sm:$0xff]
        %458 = vst [vmem:[#allocation1] ss:$9 sm:$0xff] %v374
        %459 = vst [vmem:[%s443] ss:$9 sm:$0xff] %v375
        %460 = vst [vmem:[%s445] ss:$9 sm:$0xff] %v376
        %461 = vst [vmem:[%s447] ss:$9 sm:$0xff] %v377
        %462 = vst [vmem:[%s449] ss:$9 sm:$0xff] %v378
        %v463 = vld [vmem:[#allocation1] sm:$0xff]
        %464 = vst [vmem:[#allocation1] ss:$9 sm:$0xff] %v379
        %465 = vst [vmem:[%s443] ss:$9 sm:$0xff] %v357
        %466 = vst [vmem:[%s445] ss:$9 sm:$0xff] %v380
        %467 = vst [vmem:[%s447] ss:$9 sm:$0xff] %v381
        %468 = vst [vmem:[%s449] ss:$9 sm:$0xff] %v382
        %v469 = vld [vmem:[#allocation1] sm:$0xff]
        %470 = vst [vmem:[#allocation1] ss:$9 sm:$0xff] %v383
        %471 = vst [vmem:[%s443] ss:$9 sm:$0xff] %v384
        %472 = vst [vmem:[%s445] ss:$9 sm:$0xff] %v385
        %473 = vst [vmem:[%s447] ss:$9 sm:$0xff] %v386
        %474 = vst [vmem:[%s449] ss:$9 sm:$0xff] %v360
        %v475 = vld [vmem:[#allocation1] sm:$0xff]
        %v481 = vsel %vm426, %v451, -inf
        %v482 = vsel %vm426, %v457, -inf
        %v483 = vsel %vm426, %v463, -inf
        %v484 = vsel %vm426, %v469, -inf
        %v485 = vsel %vm426, %v475, -inf
        %v486 = vmax.f32 %v481, %v485
        %v487 = vmax.f32 %v486, %v482
        %v488 = vmax.f32 %v483, %v484
        %v489 = vmax.f32 %v487, %v488
        %v490 = vrot.slane %v489, 4
        %v491 = vmax.f32 %v489, %v490
        %v492 = vrot.slane %v491, 2
        %v493 = vmax.f32 %v491, %v492
        %v494 = vrot.slane %v493, 1
        %v495 = vmax.f32 %v493, %v494
        %v496 = vld [vmem:[%s2] sm:$0x1]
        %v497 = vmul.f32 %v441, 0.04
        %v498 = vadd.f32 %v497, %v495
        %v499 = vmul.f32 %v498, 0.055555556
        %v500 = vadd.f32 %v499, %v496
        %501 = vst [vmem:[%s206] sm:$0x1] %v500
        %s502 = sand.u32 %s97, 1
        %s503 = scalar_lea.sflag [#allocation4], %s502
        %s504 = sand.u32 %s97, 1
        %s505 = scalar_lea.vmem [#allocation7], %s504
        // Predicated region
        $region41: #{tpu_custom_call.1} parent=31 // pred_check
          %p506 = pneg %p107
        $region42: #{tpu_custom_call.1} parent=31 // pred_check_branch
          %508 = sbr.rel (%p506) target = $region44
        $region43: #{tpu_custom_call.1} parent=31 // pred_region
          %510 = vsyncadd %s503, 0
          %s511 = scalar_lea.hbm %s3, %s21
          %s513 = sshll.u32 %s505, 4
          %s514 = int_to_ptr.vmem [resolvable:$true] %s513
          %s515 = sshll.u32 %s511, 4
          %s516 = int_to_ptr.hbm [resolvable:$true] %s515
          %518 = dma.vmem_to_hbm [thread:$0]  %s514, 16, %s516, %s503
        $region44: #{tpu_custom_call.1} parent=31 // pred_fallthru
          _
      $region32: #{tpu_custom_call.1} parent=5 // pred_fallthru
        _
      %p519 = scmp.le.s32.totalorder 2, %s16
      // Predicated region
      $region45: #{tpu_custom_call.1} parent=5 // pred_check
        %p520 = pneg %p519
      $region46: #{tpu_custom_call.1} parent=5 // pred_check_branch
        %522 = sbr.rel (%p520) target = $region48
      $region47: #{tpu_custom_call.1} parent=5 // pred_region
        %s523 = ssub.s32 %s16, 2
        // Predicated region
        $region49: #{tpu_custom_call.1} parent=47 // pred_check
          %p524 = pneg %p113
        $region50: #{tpu_custom_call.1} parent=47 // pred_check_branch
          %526 = sbr.rel (%p524) target = $region52
        $region51: #{tpu_custom_call.1} parent=47 // pred_region
          %s527 = sand.u32 %s98, 1
          %s528 = scalar_lea.sflag [#allocation4], %s527
          %s529 = sand.u32 %s98, 1
          %s530 = scalar_lea.vmem [#allocation7], %s529
          %532 = dma.done %s528, 16
        $region52: #{tpu_custom_call.1} parent=47 // pred_fallthru
          _
      $region48: #{tpu_custom_call.1} parent=5 // pred_fallthru
        _
    $region6: #{tpu_custom_call.1} parent=1 // loop_footer
      %s20 = sadd.s32 1, %s16
    $region7: #{tpu_custom_call.1} parent=1 // loop_footer_branch
      %15 = sbr.rel target = $region3
    $region8: #{tpu_custom_call.1} parent=1 // loop_exit
      _
    %533 = vsyncpa [#allocation3], 1
    %s534 = scalar_lea.sflag [#allocation3], 1
    %535 = vsyncpa %s534, 1
    %536 = vsyncpa [#allocation6], 1
    %537 = vsyncpa [#allocation4], 1
    %s538 = scalar_lea.sflag [#allocation4], 1
    %539 = vsyncpa %s538, 1

</llo_original>
